<compile_context>
chip_gen: v6e
topology: v6e:2x2x1
jax: 0.10.0
libtpu: 0.0.40
codegen_flags: <defaults>
</compile_context>

<pallas_src>
import functools
import math

import jax
import jax.numpy as jnp
from jax import lax
from jax.experimental import pallas as pl
from jax.experimental.pallas import tpu as pltpu


# ----------------------------------------------------------------------------
# Pallas kernel: per-row layer norm over the last axis of a (TS, Fp) tile
# ----------------------------------------------------------------------------
def _layer_norm_kernel(x_ref, gamma_ref, beta_ref, o_ref, *, eps, feat, feat_padded):
    # x_ref: (TS, Fp)   gamma_ref / beta_ref: (1, Fp)   o_ref: (TS, Fp)
    x = x_ref[...].astype(jnp.float32)
    inv_n = jnp.float32(1.0 / feat)

    # Padded lanes of x are zero (wrapper pads with zeros), so the plain sum
    # over the padded extent equals the sum over the real extent.
    s1 = jnp.sum(x, axis=-1, keepdims=True)
    mean = s1 * inv_n
    centered = x - mean

    if feat_padded != feat:
        # Mask the padded lanes out of the variance sum (they would otherwise
        # contribute mean^2 each).  Static branch -> no runtime cost when
        # feat is already a multiple of 128.
        lane = lax.broadcasted_iota(jnp.int32, x.shape, dimension=x.ndim - 1)
        sq = jnp.where(lane < feat, centered * centered, jnp.float32(0.0))
    else:
        sq = centered * centered

    var = jnp.sum(sq, axis=-1, keepdims=True) * inv_n
    inv_std = lax.rsqrt(var + jnp.float32(eps))          # EUP, ~free slot
    y = centered * inv_std

    g = gamma_ref[...].astype(jnp.float32)               # padded lanes: 0
    b = beta_ref[...].astype(jnp.float32)                # padded lanes: 0
    o_ref[...] = (g * y + b).astype(o_ref.dtype)


def _pick_tile_rows(rows: int, feat_padded: int, itemsize: int) -> int:
    """Row-tile sized against an ~4 MiB *f32* budget, rounded to the dtype's
    sublane packing (8 for f32, 16 for bf16, 32 for int8/fp8)."""
    target_bytes = 4 * 1024 * 1024                # budget in f32 bytes: the
    f32_row_bytes = feat_padded * 4               # kernel holds f32 temps
    ts = max(1, target_bytes // max(1, f32_row_bytes))
    ts = min(ts, rows)
    if ts != rows:
        pack = max(8, 32 // max(1, itemsize))     # sublane packing per dtype
        ts = max(pack, (ts // pack) * pack)
        ts = min(ts, rows)
    return ts


# ----------------------------------------------------------------------------
# Module-equivalent wrapper
# ----------------------------------------------------------------------------
class LayerNormalizationPallas:
    def __init__(self, shape, eps: float = 1e-5):
        self.shape = tuple(int(s) for s in shape)
        self.eps = float(eps)
        self.feat = int(math.prod(self.shape))
        # Parameters, initialized exactly like the torch module.
        self.gamma = jnp.ones(self.shape, dtype=jnp.float32)
        self.beta = jnp.zeros(self.shape, dtype=jnp.float32)

    def __call__(self, x):
        nd = len(self.shape)
        assert x.shape[x.ndim - nd:] == self.shape, (
            f"trailing dims {x.shape[x.ndim - nd:]} != normalized shape {self.shape}")
        lead = x.shape[: x.ndim - nd]
        rows = int(math.prod(lead)) if lead else 1
        feat = self.feat

        # Lane-dense 2-D presentation; pad the lane axis to a multiple of 128
        # so stores are unmasked full-width vst.
        feat_padded = ((feat + 127) // 128) * 128
        pad = feat_padded - feat

        x2 = x.reshape(rows, feat)
        g2 = self.gamma.reshape(1, feat)
        b2 = self.beta.reshape(1, feat)
        if pad:
            x2 = jnp.pad(x2, ((0, 0), (0, pad)))
            g2 = jnp.pad(g2, ((0, 0), (0, pad)))   # gamma pad = 0 -> out pad = 0
            b2 = jnp.pad(b2, ((0, 0), (0, pad)))

        itemsize = jnp.dtype(x.dtype).itemsize
        ts = _pick_tile_rows(rows, feat_padded, itemsize)
        grid = (pl.cdiv(rows, ts),)

        # Advisory cost hint for XLA's scheduler (cheap, helps fusion graphs).
        cost = pl.CostEstimate(
            flops=8 * rows * feat,
            transcendentals=rows,
            bytes_accessed=2 * rows * feat * itemsize + 2 * feat * 4,
        )

        out2 = pl.pallas_call(
            functools.partial(_layer_norm_kernel, eps=self.eps,
                              feat=feat, feat_padded=feat_padded),
            out_shape=jax.ShapeDtypeStruct((rows, feat_padded), x.dtype),
            grid=grid,
            in_specs=[
                pl.BlockSpec((ts, feat_padded), lambda i: (i, 0)),  # x tile
                pl.BlockSpec((1, feat_padded), lambda i: (0, 0)),   # gamma (resident)
                pl.BlockSpec((1, feat_padded), lambda i: (0, 0)),   # beta  (resident)
            ],
            out_specs=pl.BlockSpec((ts, feat_padded), lambda i: (i, 0)),
            compiler_params=pltpu.CompilerParams(
                dimension_semantics=("parallel",),     # v7x: shard across 2 TCs
                vmem_limit_bytes=48 * 1024 * 1024,     # headroom under v7x 64 MiB
            ),
            cost_estimate=cost,
        )(x2, g2, b2)

        if pad:
            out2 = out2[:, :feat]
        return out2.reshape(x.shape)


# ----------------------------------------------------------------------------
# Pure-JAX reference (mirrors the torch forward exactly)
# ----------------------------------------------------------------------------
def _ref_layer_norm(x, gamma, beta, shape, eps):
    axes = tuple(range(x.ndim - len(shape), x.ndim))
    xf = x.astype(jnp.float32)
    mean = xf.mean(axis=axes, keepdims=True)
    var = ((xf - mean) ** 2).mean(axis=axes, keepdims=True)
    std = jnp.sqrt(var + eps)
    return (gamma * ((xf - mean) / std) + beta).astype(x.dtype)


# ----------------------------------------------------------------------------
# Smoke test
# ----------------------------------------------------------------------------
if __name__ == "__main__":
    key = jax.random.PRNGKey(0)
    k1, k2, k3 = jax.random.split(key, 3)

    # Case 1: classic LN over the hidden dim — x (seq=8, batch=2, hidden=32)
    # (feat=32 exercises the lane-padding + masked-variance path)
    hidden = 32
    ln1 = LayerNormalizationPallas((hidden,), eps=1e-5)
    x1 = jax.random.normal(k1, (8, 2, hidden), dtype=jnp.float32)
    out1 = jax.block_until_ready(ln1(x1))
    ref1 = _ref_layer_norm(x1, ln1.gamma, ln1.beta, ln1.shape, ln1.eps)
    assert out1.shape == x1.shape and out1.dtype == x1.dtype
    assert jnp.allclose(out1, ref1, atol=1e-5, rtol=1e-5), "case 1 mismatch"

    # Case 2: multi-dim normalized shape — x (batch=2, 4, 16), shape=(4, 16)
    ln2 = LayerNormalizationPallas((4, 16), eps=1e-5)
    x2 = jax.random.normal(k2, (2, 4, 16), dtype=jnp.float32)
    out2 = jax.block_until_ready(ln2(x2))
    ref2 = _ref_layer_norm(x2, ln2.gamma, ln2.beta, ln2.shape, ln2.eps)
    assert out2.shape == x2.shape and out2.dtype == x2.dtype
    assert jnp.allclose(out2, ref2, atol=1e-5, rtol=1e-5), "case 2 mismatch"

    # Case 3: lane-dense path (feat = 256, multiple of 128, no padding)
    ln3 = LayerNormalizationPallas((256,), eps=1e-5)
    x3 = jax.random.normal(k3, (8, 256), dtype=jnp.float32)
    out3 = jax.block_until_ready(ln3(x3))
    ref3 = _ref_layer_norm(x3, ln3.gamma, ln3.beta, ln3.shape, ln3.eps)
    assert out3.shape == x3.shape and out3.dtype == x3.dtype
    assert jnp.allclose(out3, ref3, atol=1e-5, rtol=1e-5), "case 3 mismatch"

    print("KERNEL_OK")
</pallas_src>

<mosaic_0001>
module attributes {stable_mosaic.version = 11 : i64} {
  func.func @_layer_norm_kernel(%arg0: i32, %arg1: memref<16x128xf32, #tpu.memory_space<vmem>>, %arg2: memref<1x128xf32, #tpu.memory_space<vmem>>, %arg3: memref<1x128xf32, #tpu.memory_space<vmem>>, %arg4: memref<16x128xf32, #tpu.memory_space<vmem>>) attributes {dimension_semantics = [#tpu.dimension_semantics<parallel>], iteration_bounds = array<i64: 1>, scalar_prefetch = 0 : i64, scratch_operands = 0 : i64, tpu.core_type = #tpu.core_type<tc>, window_params = [{transform_indices = @transform_0, window_bounds = array<i64: 16, 128>}, {pipeline_mode = #tpu.pipeline_mode<synchronous>, transform_indices = @transform_1, window_bounds = array<i64: 1, 128>}, {pipeline_mode = #tpu.pipeline_mode<synchronous>, transform_indices = @transform_2, window_bounds = array<i64: 1, 128>}, {transform_indices = @transform_3, window_bounds = array<i64: 16, 128>}]} {
    %c0 = arith.constant 0 : index
    %c0_0 = arith.constant 0 : index
    %0 = vector.load %arg1[%c0, %c0_0] : memref<16x128xf32, #tpu.memory_space<vmem>>, vector<16x128xf32>
    %cst = arith.constant dense<0.000000e+00> : vector<16xf32>
    %1 = vector.multi_reduction <add>, %0, %cst [1] : vector<16x128xf32> to vector<16xf32>
    %2 = vector.shape_cast %1 : vector<16xf32> to vector<16x1xf32>
    %cst_1 = arith.constant 3.125000e-02 : f32
    %3 = vector.broadcast %cst_1 : f32 to vector<16x1xf32>
    %4 = arith.mulf %2, %3 : vector<16x1xf32>
    %5 = vector.broadcast %4 : vector<16x1xf32> to vector<16x128xf32>
    %6 = arith.subf %0, %5 : vector<16x128xf32>
    %7 = tpu.iota {dimensions = array<i32: 1>} : vector<16x128xi32>
    %c32_i32 = arith.constant 32 : i32
    %8 = vector.broadcast %c32_i32 : i32 to vector<16x128xi32>
    %9 = arith.cmpi slt, %7, %8 : vector<16x128xi32>
    %10 = arith.mulf %6, %6 : vector<16x128xf32>
    %cst_2 = arith.constant 0.000000e+00 : f32
    %11 = vector.broadcast %cst_2 : f32 to vector<16x128xf32>
    %12 = arith.select %9, %10, %11 : vector<16x128xi1>, vector<16x128xf32>
    %cst_3 = arith.constant dense<0.000000e+00> : vector<16xf32>
    %13 = vector.multi_reduction <add>, %12, %cst_3 [1] : vector<16x128xf32> to vector<16xf32>
    %14 = vector.shape_cast %13 : vector<16xf32> to vector<16x1xf32>
    %cst_4 = arith.constant 3.125000e-02 : f32
    %15 = vector.broadcast %cst_4 : f32 to vector<16x1xf32>
    %16 = arith.mulf %14, %15 : vector<16x1xf32>
    %cst_5 = arith.constant 9.99999974E-6 : f32
    %17 = vector.broadcast %cst_5 : f32 to vector<16x1xf32>
    %18 = arith.addf %16, %17 : vector<16x1xf32>
    %19 = math.rsqrt %18 : vector<16x1xf32>
    %20 = vector.broadcast %19 : vector<16x1xf32> to vector<16x128xf32>
    %21 = arith.mulf %6, %20 : vector<16x128xf32>
    %c0_6 = arith.constant 0 : index
    %c0_7 = arith.constant 0 : index
    %22 = vector.load %arg2[%c0_6, %c0_7] : memref<1x128xf32, #tpu.memory_space<vmem>>, vector<1x128xf32>
    %c0_8 = arith.constant 0 : index
    %c0_9 = arith.constant 0 : index
    %23 = vector.load %arg3[%c0_8, %c0_9] : memref<1x128xf32, #tpu.memory_space<vmem>>, vector<1x128xf32>
    %24 = vector.broadcast %22 : vector<1x128xf32> to vector<16x128xf32>
    %25 = arith.mulf %24, %21 : vector<16x128xf32>
    %26 = vector.broadcast %23 : vector<1x128xf32> to vector<16x128xf32>
    %27 = arith.addf %25, %26 : vector<16x128xf32>
    %c0_10 = arith.constant 0 : index
    %c0_11 = arith.constant 0 : index
    %28 = vector.load %arg4[%c0_10, %c0_11] : memref<16x128xf32, #tpu.memory_space<vmem>>, vector<16x128xf32>
    tpu.vector_store %arg4[%c0_10, %c0_11], %27 {strides = array<i32>} : memref<16x128xf32, #tpu.memory_space<vmem>>, vector<16x128xf32>,
    return
  }
  func.func @transform_0(%arg0: i32) -> (i32, i32) {
    %c0_i32 = arith.constant 0 : i32
    %c0_i32_0 = arith.constant 0 : i32
    return %arg0, %c0_i32 : i32, i32
  }
  func.func @transform_1(%arg0: i32) -> (i32, i32) {
    %c0_i32 = arith.constant 0 : i32
    %c0_i32_0 = arith.constant 0 : i32
    %c0_i32_1 = arith.constant 0 : i32
    return %c0_i32, %c0_i32_0 : i32, i32
  }
  func.func @transform_2(%arg0: i32) -> (i32, i32) {
    %c0_i32 = arith.constant 0 : i32
    %c0_i32_0 = arith.constant 0 : i32
    %c0_i32_1 = arith.constant 0 : i32
    return %c0_i32, %c0_i32_0 : i32, i32
  }
  func.func @transform_3(%arg0: i32) -> (i32, i32) {
    %c0_i32 = arith.constant 0 : i32
    %c0_i32_0 = arith.constant 0 : i32
    return %arg0, %c0_i32 : i32, i32
  }
}

</mosaic_0001>

<llo_original>
// kernel: tpu_custom_call.1
$region0: #{tpu_custom_call.1}
  #allocation0 [shape = 'u32[]', space=smem, size = 0x4, offset = 0x4, fixed_abs, tag = 'smem constant byte address 0x4 - core index']
  #allocation1 [shape = 'u32[144,128]{1,0:T(1,128)}', space=vmem, size = 0x12000, scoped, tag = 'internal scratch']
  %s0 = inlined_call_operand.hbm [shape: f32[16,128], index: 0, kind: input, shape index: {}]
  %s1 = inlined_call_operand.vmem [shape: f32[1,128], index: 1, kind: input, shape index: {}]
  %s2 = inlined_call_operand.vmem [shape: f32[1,128], index: 2, kind: input, shape index: {}]
  %s3 = inlined_call_operand.hbm [shape: f32[16,128], index: 3, kind: output, shape index: {}]
  %s4 = sld [smem:[#allocation0]]
  $region26: #{tpu_custom_call.1} parent=0
    _
  %s6 = ssub.s32 1, %s4
  %s7 = scalar_select 0, %s6, %s4
  $region1: #{tpu_custom_call.1} parent=0
    #allocation2 [shape = 'u8[8192]{0}', space=vmem, size = 0x2000, scoped, tag = 'input window, operand 0, single buffered']
    #allocation3 [shape = 's32[1]{0}', space=sflag, size = 0x4, scoped, tag = 'scoped memory for tpu_custom_call.1']
    #allocation4 [shape = 's32[1]{0}', space=sflag, size = 0x4, scoped, tag = 'scoped memory for tpu_custom_call.1']
    #allocation5 [shape = 'u8[8192]{0}', space=vmem, size = 0x2000, scoped, tag = 'output window, operand 0, single buffered']
    %8 = vsyncpa [#allocation3], 0
    %9 = vsyncpa [#allocation4], 0
    // Predicated region
    $region2: #{tpu_custom_call.1} parent=1 // pred_check
      _
    $region3: #{tpu_custom_call.1} parent=1 // pred_check_branch
      %11 = sbr.rel (0) target = $region5
    $region4: #{tpu_custom_call.1} parent=1 // pred_region
      %s13 = ssub.s32 256, 256
      %14 = vsyncadd [#allocation3], %s13
      %s15 = sshll.u32 [#allocation2], 4
      %s16 = int_to_ptr.vmem [resolvable:$true] %s15
      %21 = dma.hbm_to_vmem [thread:$0]  %s0, 256, %s16, [#allocation3], 128, 128, 8
    $region5: #{tpu_custom_call.1} parent=1 // pred_fallthru
      _
    // Predicated region
    $region6: #{tpu_custom_call.1} parent=1 // pred_check
      _
    $region7: #{tpu_custom_call.1} parent=1 // pred_check_branch
      %23 = sbr.rel (0) target = $region9
    $region8: #{tpu_custom_call.1} parent=1 // pred_region
      _
    $region9: #{tpu_custom_call.1} parent=1 // pred_fallthru
      _
    // Predicated region
    $region10: #{tpu_custom_call.1} parent=1 // pred_check
      _
    $region11: #{tpu_custom_call.1} parent=1 // pred_check_branch
      %25 = sbr.rel (0) target = $region13
    $region12: #{tpu_custom_call.1} parent=1 // pred_region
      _
    $region13: #{tpu_custom_call.1} parent=1 // pred_fallthru
      _
    // Predicated region
    $region14: #{tpu_custom_call.1} parent=1 // pred_check
      _
    $region15: #{tpu_custom_call.1} parent=1 // pred_check_branch
      %27 = sbr.rel (0) target = $region17
    $region16: #{tpu_custom_call.1} parent=1 // pred_region
      %28 = dma.done [#allocation3], 256
    $region17: #{tpu_custom_call.1} parent=1 // pred_fallthru
      _
    %v29 = vld [vmem:[#allocation2] sm:$0xff]
    %v30 = vld [vmem:[#allocation2 + $0x8] sm:$0xff]
    %31 = vadd.xlane.f32.xlu0 %v29
    %v32 = vpop.xlane.xlu0 %31
    %33 = vadd.xlane.f32.xlu0 %v30
    %v34 = vpop.xlane.xlu0 %33
    %v35 = vmul.f32 %v32, 0.03125
    %v36 = vmul.f32 %v34, 0.03125
    %v37 = vsub.f32 %v29, %v35
    %v38 = vsub.f32 %v30, %v36
    %v39 = vlaneseq
    %v40 = vand.u32 %v39, 127
    %vm41 = vcmp.lt.s32.totalorder %v40, 32
    %v42 = vmul.f32 %v37, %v37
    %v43 = vmul.f32 %v38, %v38
    %v44 = vsel %vm41, %v42, 0.0
    %v45 = vsel %vm41, %v43, 0.0
    %46 = vadd.xlane.f32.xlu0 %v44
    %v47 = vpop.xlane.xlu0 %46
    %48 = vadd.xlane.f32.xlu0 %v45
    %v49 = vpop.xlane.xlu0 %48
    %v50 = vmul.f32 %v47, 0.03125
    %v51 = vmul.f32 %v49, 0.03125
    %v52 = vadd.f32 %v50, 1e-05
    %v53 = vadd.f32 %v51, 1e-05
    %v54 = vrsqrt.pop %v52
    %v55 = vrsqrt.pop %v53
    %v56 = vmul.f32 %v37, %v54
    %v57 = vmul.f32 %v38, %v55
    %v58 = vld [vmem:[%s1] sm:$0x1]
    %v59 = vld [vmem:[%s2] sm:$0x1]
    %v61 = vlaneseq
    %v62 = vshrl.u32 %v61, 7
    %v63 = vsub.s32 0, %v62
    %v64 = vrot.slane %v58, %v63
    %v66 = vmul.f32 %v64, %v56
    %v67 = vmul.f32 %v64, %v57
    %v69 = vlaneseq
    %v70 = vshrl.u32 %v69, 7
    %v71 = vsub.s32 0, %v70
    %v72 = vrot.slane %v59, %v71
    %v74 = vadd.f32 %v66, %v72
    %v75 = vadd.f32 %v67, %v72
    %76 = vst [vmem:[#allocation5] sm:$0xff] %v74
    %77 = vst [vmem:[#allocation5 + $0x8] sm:$0xff] %v75
    // Predicated region
    $region18: #{tpu_custom_call.1} parent=1 // pred_check
      _
    $region19: #{tpu_custom_call.1} parent=1 // pred_check_branch
      %79 = sbr.rel (0) target = $region21
    $region20: #{tpu_custom_call.1} parent=1 // pred_region
      %s81 = ssub.s32 256, 256
      %82 = vsyncadd [#allocation4], %s81
      %s83 = sshll.u32 [#allocation5], 4
      %s84 = int_to_ptr.vmem [resolvable:$true] %s83
      %89 = dma.vmem_to_hbm [thread:$0]  %s84, 256, %s3, [#allocation4], 128, 128, 8
    $region21: #{tpu_custom_call.1} parent=1 // pred_fallthru
      _
    // Predicated region
    $region22: #{tpu_custom_call.1} parent=1 // pred_check
      _
    $region23: #{tpu_custom_call.1} parent=1 // pred_check_branch
      %91 = sbr.rel (0) target = $region25
    $region24: #{tpu_custom_call.1} parent=1 // pred_region
      %92 = dma.done [#allocation4], 256
    $region25: #{tpu_custom_call.1} parent=1 // pred_fallthru
      _
    %93 = vsyncpa [#allocation3], 1
    %94 = vsyncpa [#allocation4], 1

</llo_original>
